<compile_context>
chip_gen: v7x
topology: tpu7x:2x2x1
jax: 0.10.0
libtpu: 0.0.40
codegen_flags: <defaults>
</compile_context>

<pallas_src>
import jax
import jax.numpy as jnp
from jax.experimental import pallas as pl
from jax.experimental.pallas import tpu as pltpu


def _make_upsample_kernel(tile_cols, chunk):
    """Kernel: out[:, 2c], out[:, 2c+1] = x[:, c], via chunked matmuls against S."""
    n_chunks = tile_cols // chunk

    def kernel(x_ref, s_ref, o_ref):
        # s_ref: (chunk, 2*chunk) 0/1 expansion matrix; constant index_map ->
        # fetched into VMEM once for the whole grid.
        s = s_ref[...]
        # Fully unrolled static loop: static, lane-aligned ref slices, so each
        # chunk loads/stores exactly its own (rows, chunk)/(rows, 2*chunk) tile.
        for c in range(n_chunks):
            xc = x_ref[:, c * chunk:(c + 1) * chunk]
            if xc.dtype != s.dtype:
                xc = xc.astype(s.dtype)
            out = jnp.dot(xc, s, preferred_element_type=jnp.float32)
            o_ref[:, 2 * c * chunk:2 * (c + 1) * chunk] = out.astype(o_ref.dtype)

    return kernel


def _pick_tile(dim, candidates):
    for t in candidates:
        if dim % t == 0:
            return t
    return dim  # full (untiled) dimension -- allowed by the full-dim exception


def _reference(x):
    # PyTorch nn.Upsample(scale_factor=2, mode='nearest') on (N, 1, L):
    # out[n, k] = x[n, k // 2]
    return jnp.repeat(x, 2, axis=1)


def upsample1d_nearest2x(x):
    """x: (N, L) -> (N, 2L) with out[n, k] = x[n, k // 2]."""
    assert x.ndim == 2
    N, L = x.shape
    out_dtype = x.dtype

    # MXU compute dtype: keep bf16 native (single-pass MXU); otherwise f32.
    # Exact for float data; integer inputs are exact only up to 2**24.
    compute_dtype = jnp.bfloat16 if x.dtype == jnp.bfloat16 else jnp.float32

    # ---- Fold a tiny batch into rows: (N, L) -> (N*k, L/k) (free row-major
    # reshape; the 2x nearest upsample is local along L so it commutes). ----
    fold = 1
    if N < 8 and L % 128 == 0:
        while (N * fold < 8 and L % (2 * fold) == 0
               and (L // (2 * fold)) % 128 == 0):
            fold *= 2
    rows, cols = N * fold, L // fold
    xk = x.reshape(rows, cols) if fold > 1 else x

    # ---- Bound tile sizes for long, non-128-divisible lengths by padding
    # (padded zero columns only produce padded output columns; sliced off). ----
    pad = 0
    if cols % 128 != 0 and cols > 512:
        pad = (-cols) % 128
        xk = jnp.pad(xk, ((0, 0), (0, pad)))
        cols += pad

    tile_rows = _pick_tile(rows, (256, 128, 64, 32, 16, 8))
    tile_cols = _pick_tile(cols, (1024, 512, 256, 128))
    chunk = 128 if tile_cols % 128 == 0 else tile_cols

    # 0/1 block-diagonal expansion matrix, built once outside the grid loop:
    # S[i, c] = 1 iff c in {2i, 2i+1}  =>  (x @ S)[n, c] = x[n, c // 2].
    ri = jnp.arange(chunk, dtype=jnp.int32)[:, None]
    cj = jnp.arange(2 * chunk, dtype=jnp.int32)[None, :]
    expand = ((cj >= 2 * ri) & (cj < 2 * ri + 2)).astype(compute_dtype)

    grid = (rows // tile_rows, cols // tile_cols)

    out = pl.pallas_call(
        _make_upsample_kernel(tile_cols, chunk),
        out_shape=jax.ShapeDtypeStruct((rows, 2 * cols), out_dtype),
        grid=grid,
        in_specs=[
            pl.BlockSpec((tile_rows, tile_cols), lambda i, j: (i, j)),
            # Constant block index -> DMA'd once, stays resident in VMEM.
            pl.BlockSpec((chunk, 2 * chunk), lambda i, j: (0, 0)),
        ],
        out_specs=pl.BlockSpec((tile_rows, 2 * tile_cols), lambda i, j: (i, j)),
        compiler_params=pltpu.CompilerParams(
            dimension_semantics=("parallel", "parallel"),
            vmem_limit_bytes=32 * 1024 * 1024,
        ),
    )(xk, expand)

    if pad:
        out = out[:, :2 * (cols - pad)]
    if fold > 1:
        out = out.reshape(N, 2 * L)
    return out


if __name__ == "__main__":
    # Shape implied by the module's forward: x is (batch, length).
    key = jax.random.PRNGKey(0)
    N, L = 2, 16
    x = jax.random.normal(key, (N, L), dtype=jnp.float32)

    out = jax.block_until_ready(upsample1d_nearest2x(x))
    ref = _reference(x)
    assert out.shape == (N, 2 * L), f"bad shape {out.shape}"
    assert jnp.allclose(out, ref, atol=1e-6, rtol=1e-6), "mismatch vs nearest upsample"

    # Extra small shapes exercising the folded / chunked / bf16 paths.
    x2 = jax.random.normal(jax.random.PRNGKey(1), (2, 256), dtype=jnp.float32)
    o2 = jax.block_until_ready(upsample1d_nearest2x(x2))
    assert jnp.allclose(o2, _reference(x2), atol=1e-6, rtol=1e-6)

    x3 = jax.random.normal(jax.random.PRNGKey(2), (4, 384),
                           dtype=jnp.float32).astype(jnp.bfloat16)
    o3 = jax.block_until_ready(upsample1d_nearest2x(x3))
    assert jnp.allclose(o3.astype(jnp.float32),
                        _reference(x3).astype(jnp.float32), atol=1e-2, rtol=1e-2)

    print("KERNEL_OK")
</pallas_src>

<mosaic_0001>
module attributes {stable_mosaic.version = 11 : i64} {
  func.func @kernel(%arg0: i32, %arg1: i32, %arg2: memref<2x16xf32, #tpu.memory_space<vmem>>, %arg3: memref<16x32xf32, #tpu.memory_space<vmem>>, %arg4: memref<2x32xf32, #tpu.memory_space<vmem>>) attributes {dimension_semantics = [#tpu.dimension_semantics<parallel>, #tpu.dimension_semantics<parallel>], iteration_bounds = array<i64: 1, 1>, scalar_prefetch = 0 : i64, scratch_operands = 0 : i64, tpu.core_type = #tpu.core_type<tc>, window_params = [{transform_indices = @transform_0, window_bounds = array<i64: 2, 16>}, {pipeline_mode = #tpu.pipeline_mode<synchronous>, transform_indices = @transform_1, window_bounds = array<i64: 16, 32>}, {transform_indices = @transform_2, window_bounds = array<i64: 2, 32>}]} {
    %c0 = arith.constant 0 : index
    %c0_0 = arith.constant 0 : index
    %0 = vector.load %arg3[%c0, %c0_0] : memref<16x32xf32, #tpu.memory_space<vmem>>, vector<16x32xf32>
    %c0_1 = arith.constant 0 : index
    %c0_2 = arith.constant 0 : index
    %1 = vector.load %arg2[%c0_1, %c0_2] : memref<2x16xf32, #tpu.memory_space<vmem>>, vector<2x16xf32>
    %cst = arith.constant dense<0.000000e+00> : vector<2x32xf32>
    %2 = tpu.matmul %1, %0, %cst {dimension_numbers = #tpu.dot_dimension_numbers<[1], [0], [0], [1], [0, 0, 1, 1], [], []>} : vector<2x16xf32>, vector<16x32xf32>, vector<2x32xf32> -> vector<2x32xf32>
    %c0_3 = arith.constant 0 : index
    %c0_4 = arith.constant 0 : index
    %3 = vector.load %arg4[%c0_3, %c0_4] : memref<2x32xf32, #tpu.memory_space<vmem>>, vector<2x32xf32>
    tpu.vector_store %arg4[%c0_3, %c0_4], %2 {strides = array<i32>} : memref<2x32xf32, #tpu.memory_space<vmem>>, vector<2x32xf32>,
    return
  }
  func.func @transform_0(%arg0: i32, %arg1: i32) -> (i32, i32) {
    %c0_i32 = arith.constant 0 : i32
    return %arg0, %arg1 : i32, i32
  }
  func.func @transform_1(%arg0: i32, %arg1: i32) -> (i32, i32) {
    %c0_i32 = arith.constant 0 : i32
    %c0_i32_0 = arith.constant 0 : i32
    %c0_i32_1 = arith.constant 0 : i32
    return %c0_i32, %c0_i32_0 : i32, i32
  }
  func.func @transform_2(%arg0: i32, %arg1: i32) -> (i32, i32) {
    %c0_i32 = arith.constant 0 : i32
    return %arg0, %arg1 : i32, i32
  }
}

</mosaic_0001>

<llo_original>
// kernel: tpu_custom_call.1
$region0: #{tpu_custom_call.1}
  #allocation0 [shape = 'u32[]', space=smem, size = 0x4, offset = 0x4, fixed_abs, tag = 'smem constant byte address 0x4 - core index']
  #allocation1 [shape = 'u32[144,128]{1,0:T(1,128)}', space=vmem, size = 0x12000, scoped, tag = 'internal scratch']
  %s0 = inlined_call_operand.hbm [shape: f32[2,16], index: 0, kind: input, shape index: {}]
  %s1 = inlined_call_operand.hbm [shape: f32[16,32], index: 1, kind: input, shape index: {}]
  %s2 = inlined_call_operand.hbm [shape: f32[2,32], index: 2, kind: output, shape index: {}]
  %s3 = sld [smem:[#allocation0]]
  $region26: #{tpu_custom_call.1} parent=0
    _
  %s5 = ssub.s32 1, %s3
  %s6 = scalar_select 0, %s5, %s3
  $region1: #{tpu_custom_call.1} parent=0
    #allocation2 [shape = 'u8[1024]{0}', space=vmem, size = 0x400, scoped, tag = 'input window, operand 0, single buffered']
    #allocation3 [shape = 's32[1]{0}', space=sflag, size = 0x4, scoped, tag = 'scoped memory for tpu_custom_call.1']
    #allocation4 [shape = 's32[1]{0}', space=sflag, size = 0x4, scoped, tag = 'scoped memory for tpu_custom_call.1']
    #allocation5 [shape = 'u8[8192]{0}', space=vmem, size = 0x2000, scoped, tag = 'input window, operand 1, single buffered']
    #allocation6 [shape = 's32[1]{0}', space=sflag, size = 0x4, scoped, tag = 'scoped memory for tpu_custom_call.1']
    #allocation7 [shape = 'u8[1024]{0}', space=vmem, size = 0x400, scoped, tag = 'output window, operand 0, single buffered']
    %7 = vsyncpa [#allocation3], 0
    %8 = vsyncpa [#allocation6], 0
    %9 = vsyncpa [#allocation4], 0
    // Predicated region
    $region2: #{tpu_custom_call.1} parent=1 // pred_check
      _
    $region3: #{tpu_custom_call.1} parent=1 // pred_check_branch
      %11 = sbr.rel (0) target = $region5
    $region4: #{tpu_custom_call.1} parent=1 // pred_region
      %s13 = ssub.s32 32, 32
      %14 = vsyncadd [#allocation3], %s13
      %s16 = sshll.u32 [#allocation2], 4
      %s17 = int_to_ptr.vmem [resolvable:$true] %s16
      %19 = dma.hbm_to_vmem [thread:$0]  %s0, 32, %s17, [#allocation3]
    $region5: #{tpu_custom_call.1} parent=1 // pred_fallthru
      _
    // Predicated region
    $region6: #{tpu_custom_call.1} parent=1 // pred_check
      _
    $region7: #{tpu_custom_call.1} parent=1 // pred_check_branch
      %21 = sbr.rel (0) target = $region9
    $region8: #{tpu_custom_call.1} parent=1 // pred_region
      %s23 = ssub.s32 256, 256
      %24 = vsyncadd [#allocation6], %s23
      %s25 = sshll.u32 [#allocation5], 4
      %s26 = int_to_ptr.vmem [resolvable:$true] %s25
      %31 = dma.hbm_to_vmem [thread:$0]  %s1, 256, %s26, [#allocation6], 128, 128, 8
    $region9: #{tpu_custom_call.1} parent=1 // pred_fallthru
      _
    // Predicated region
    $region10: #{tpu_custom_call.1} parent=1 // pred_check
      _
    $region11: #{tpu_custom_call.1} parent=1 // pred_check_branch
      %33 = sbr.rel (0) target = $region13
    $region12: #{tpu_custom_call.1} parent=1 // pred_region
      %34 = dma.done [#allocation3], 32
    $region13: #{tpu_custom_call.1} parent=1 // pred_fallthru
      _
    // Predicated region
    $region14: #{tpu_custom_call.1} parent=1 // pred_check
      _
    $region15: #{tpu_custom_call.1} parent=1 // pred_check_branch
      %36 = sbr.rel (0) target = $region17
    $region16: #{tpu_custom_call.1} parent=1 // pred_region
      %37 = dma.done [#allocation6], 256
    $region17: #{tpu_custom_call.1} parent=1 // pred_fallthru
      _
    %v38 = vld [vmem:[#allocation5] sm:$0xff]
    %v39 = vld [vmem:[#allocation5 + $0x8] sm:$0xff]
    %v40 = vld [vmem:[#allocation2] sm:$0x3]
    %vm41 = vcmask 130048
    %v43 = vsel %vm41, %v40, 0
    %45 = vmatprep.subr.mxu0 0.0
    %46 = vmatpush1.msra.mxu0 %v38
    %47 = vmatprep.subr.mxu0 0.0
    %48 = vmatpush1.msra.mxu0 %v39
    %49 = vmatprep.subr.mxu0 0.0
    %50 = vmatpush1.msra.mxu0 0.0
    %51 = vmatprep.subr.mxu0 0.0
    %52 = vmatpush1.msra.mxu0 0.0
    %53 = vmatprep.subr.mxu0 0.0
    %54 = vmatpush1.msra.mxu0 0.0
    %55 = vmatprep.subr.mxu0 0.0
    %56 = vmatpush1.msra.mxu0 0.0
    %57 = vmatprep.subr.mxu0 0.0
    %58 = vmatpush1.msra.mxu0 0.0
    %59 = vmatprep.subr.mxu0 0.0
    %60 = vmatpush1.msra.mxu0 0.0
    %61 = vmatprep.subr.mxu0 0.0
    %62 = vmatpush1.msra.mxu0 0.0
    %63 = vmatprep.subr.mxu0 0.0
    %64 = vmatpush1.msra.mxu0 0.0
    %65 = vmatprep.subr.mxu0 0.0
    %66 = vmatpush1.msra.mxu0 0.0
    %67 = vmatprep.subr.mxu0 0.0
    %68 = vmatpush1.msra.mxu0 0.0
    %69 = vmatprep.subr.mxu0 0.0
    %70 = vmatpush1.msra.mxu0 0.0
    %71 = vmatprep.subr.mxu0 0.0
    %72 = vmatpush1.msra.mxu0 0.0
    %73 = vmatprep.subr.mxu0 0.0
    %74 = vmatpush1.msra.mxu0 0.0
    %75 = vmatprep.subr.mxu0 0.0
    %76 = vmatpush1.msra.mxu0 0.0
    %77 = vmatprep.subr.mxu0 0.0
    %78 = vmatpush1.msra.mxu0 0.0
    %79 = vmatprep.subr.mxu0 0.0
    %80 = vmatpush1.msra.mxu0 0.0
    %81 = vmatprep.subr.mxu0 0.0
    %82 = vmatpush1.msra.mxu0 0.0
    %83 = vmatprep.subr.mxu0 0.0
    %84 = vmatpush1.msra.mxu0 0.0
    %85 = vmatprep.subr.mxu0 0.0
    %86 = vmatpush1.msra.mxu0 0.0
    %87 = vmatprep.subr.mxu0 0.0
    %88 = vmatpush1.msra.mxu0 0.0
    %89 = vmatprep.subr.mxu0 0.0
    %90 = vmatpush1.msra.mxu0 0.0
    %91 = vmatprep.subr.mxu0 0.0
    %92 = vmatpush1.msra.mxu0 0.0
    %93 = vmatprep.subr.mxu0 0.0
    %94 = vmatpush1.msra.mxu0 0.0
    %95 = vmatprep.subr.mxu0 0.0
    %96 = vmatpush1.msra.mxu0 0.0
    %97 = vmatprep.subr.mxu0 0.0
    %98 = vmatpush1.msra.mxu0 0.0
    %99 = vmatprep.subr.mxu0 0.0
    %100 = vmatpush1.msra.mxu0 0.0
    %101 = vmatprep.subr.mxu0 0.0
    %102 = vmatpush1.msra.mxu0 0.0
    %103 = vmatprep.subr.mxu0 0.0
    %104 = vmatpush1.msra.mxu0 0.0
    %105 = vmatprep.subr.mxu0 0.0
    %106 = vmatpush1.msra.mxu0 0.0
    %107 = vmatprep.subr.mxu0 0.0
    %108 = vmatpush1.msra.mxu0 0.0
    %109 = vmatprep.mubr.f32.mxu0 0.0
    %110 = vmatmul.mubr.f32.gmra.mrb[0].mxu0 %v43
    %v111 = vpop.f32.mrb[0].mxu0
    %v112 = vadd.f32 0.0, %v111
    %v113 = vpop.f32.mrb[0].mxu0
    %114 = vdwg.mxu0
    %vm115 = vcmask 254976
    %116 = vst.msk [vmem:[#allocation7] sm:$0x3] %vm115, %v112
    // Predicated region
    $region18: #{tpu_custom_call.1} parent=1 // pred_check
      _
    $region19: #{tpu_custom_call.1} parent=1 // pred_check_branch
      %118 = sbr.rel (0) target = $region21
    $region20: #{tpu_custom_call.1} parent=1 // pred_region
      %s120 = ssub.s32 32, 32
      %121 = vsyncadd [#allocation4], %s120
      %s123 = sshll.u32 [#allocation7], 4
      %s124 = int_to_ptr.vmem [resolvable:$true] %s123
      %126 = dma.vmem_to_hbm [thread:$0]  %s124, 32, %s2, [#allocation4]
    $region21: #{tpu_custom_call.1} parent=1 // pred_fallthru
      _
    // Predicated region
    $region22: #{tpu_custom_call.1} parent=1 // pred_check
      _
    $region23: #{tpu_custom_call.1} parent=1 // pred_check_branch
      %128 = sbr.rel (0) target = $region25
    $region24: #{tpu_custom_call.1} parent=1 // pred_region
      %129 = dma.done [#allocation4], 32
    $region25: #{tpu_custom_call.1} parent=1 // pred_fallthru
      _
    %130 = vsyncpa [#allocation3], 1
    %131 = vsyncpa [#allocation6], 1
    %132 = vsyncpa [#allocation4], 1

</llo_original>
